<compile_context>
chip_gen: v5e
topology: v5e:2x2
jax: 0.10.0
libtpu: 0.0.40
codegen_flags: <defaults>
</compile_context>

<pallas_src>
import math

import jax
import jax.numpy as jnp
from jax.experimental import pallas as pl
from jax.experimental.pallas import tpu as pltpu

HIDDEN1 = 256
HIDDEN2 = 128
HEAD_PAD = 128                      # fused actor(2) + critic(1) head padded to 128 lanes
COL_MEAN, COL_LOGSTD, COL_VALUE = 0, 1, 2


def _round_up(x, m):
    return (x + m - 1) // m * m


def actor_critic_kernel(x_ref, w1_ref, w2_ref, wh_ref, b12_ref, bh_ref, out_ref):
    """One batch tile: two shared ReLU layers + one fused (actor||critic) head matmul.

    out[:, 0] = mean, out[:, 1] = std, out[:, 2] = value, lanes 3..127 = don't care.
    """
    x = x_ref[...]

    b1 = b12_ref[:, :HIDDEN1]
    b2 = b12_ref[:, HIDDEN1:HIDDEN1 + HIDDEN2]

    # shared layer 1: Linear(num_inputs, 256) + ReLU  (f32 accumulation on the MXU)
    h = jnp.dot(x, w1_ref[...], preferred_element_type=jnp.float32) + b1
    h = jnp.maximum(h, 0.0)

    # shared layer 2: Linear(256, 128) + ReLU
    h = jnp.dot(h.astype(w2_ref.dtype), w2_ref[...],
                preferred_element_type=jnp.float32) + b2
    h = jnp.maximum(h, 0.0)

    # Dropout(0.1) is identity in the inference forward.
    # TODO(synk): training-mode dropout via pltpu.prng_seed + pltpu.prng_random_bits mask.

    # fused head: one 128-lane matmul covers actor (mean, log_std) and critic (value).
    a = jnp.dot(h.astype(wh_ref.dtype), wh_ref[...],
                preferred_element_type=jnp.float32) + bh_ref[...]

    # std = exp(clamp(log_std, -10, 2)) on the whole tile (no width-1 lane slices),
    # merged back into lane COL_LOGSTD only via a lane-iota select.
    std_tile = jnp.exp(jnp.clip(a, -10.0, 2.0))
    lane = jax.lax.broadcasted_iota(jnp.int32, a.shape, dimension=1)
    out_ref[...] = jnp.where(lane == COL_LOGSTD, std_tile, a)


def continuous_actor_critic_forward(x, packed, *, tile_b=512, compute_dtype=jnp.float32):
    """x: [B, num_inputs] f32.  packed: dict from pack_params().  Returns (mean, std, value)."""
    B, num_inputs = x.shape

    tile_b = _round_up(min(tile_b, _round_up(B, 8)), 8)
    b_padded = _round_up(B, tile_b)
    if b_padded != B:
        x = jnp.pad(x, ((0, b_padded - B), (0, 0)))
    grid = (b_padded // tile_b,)

    # Optional bf16 MXU inputs (halves x/weight HBM bytes on v5e/v6e); accumulation is f32.
    x_c = x.astype(compute_dtype)
    w1 = packed["w1"].astype(compute_dtype)
    w2 = packed["w2"].astype(compute_dtype)
    wh = packed["wh"].astype(compute_dtype)
    b12 = packed["b12"]
    bh = packed["bh"]

    out = pl.pallas_call(
        actor_critic_kernel,
        out_shape=jax.ShapeDtypeStruct((b_padded, HEAD_PAD), jnp.float32),
        grid_spec=pl.GridSpec(
            grid=grid,
            in_specs=[
                pl.BlockSpec((tile_b, num_inputs), lambda i: (i, 0)),  # x: batch-tiled
                pl.BlockSpec(w1.shape, lambda i: (0, 0)),              # weights VMEM-resident
                pl.BlockSpec(w2.shape, lambda i: (0, 0)),
                pl.BlockSpec(wh.shape, lambda i: (0, 0)),
                pl.BlockSpec(b12.shape, lambda i: (0, 0)),
                pl.BlockSpec(bh.shape, lambda i: (0, 0)),
            ],
            out_specs=pl.BlockSpec((tile_b, HEAD_PAD), lambda i: (i, 0)),  # lane-dense slab
        ),
        compiler_params=pltpu.CompilerParams(
            dimension_semantics=("parallel",),  # batch axis can shard across TCs (v7x)
        ),
    )(x_c, w1, w2, wh, b12, bh)

    out = out[:B]
    mean = out[:, COL_MEAN:COL_MEAN + 1]
    std = out[:, COL_LOGSTD:COL_LOGSTD + 1]
    value = out[:, COL_VALUE:COL_VALUE + 1]
    return mean, std, value


def init_params(key, num_inputs):
    """PyTorch nn.Linear default init (U[-1/sqrt(fan_in), 1/sqrt(fan_in)]).
    Weights stored [in_features, out_features] (transposed vs. PyTorch)."""
    def linear(k, fan_in, fan_out):
        kw, kb = jax.random.split(k)
        bound = 1.0 / math.sqrt(fan_in)
        w = jax.random.uniform(kw, (fan_in, fan_out), jnp.float32, -bound, bound)
        b = jax.random.uniform(kb, (fan_out,), jnp.float32, -bound, bound)
        return w, b

    k1, k2, k3, k4 = jax.random.split(key, 4)
    w1, b1 = linear(k1, num_inputs, HIDDEN1)
    w2, b2 = linear(k2, HIDDEN1, HIDDEN2)
    wa, ba = linear(k3, HIDDEN2, 2)   # actor: (mean, log_std)
    wc, bc = linear(k4, HIDDEN2, 1)   # critic: value
    return dict(w1=w1, b1=b1, w2=w2, b2=b2, wa=wa, ba=ba, wc=wc, bc=bc)


def pack_params(p):
    """Fuse actor+critic into a padded 128-lane head and concat the shared-layer biases."""
    wh = jnp.zeros((HIDDEN2, HEAD_PAD), jnp.float32)
    wh = wh.at[:, COL_MEAN].set(p["wa"][:, 0])
    wh = wh.at[:, COL_LOGSTD].set(p["wa"][:, 1])
    wh = wh.at[:, COL_VALUE].set(p["wc"][:, 0])
    bh = jnp.zeros((1, HEAD_PAD), jnp.float32)
    bh = bh.at[0, COL_MEAN].set(p["ba"][0])
    bh = bh.at[0, COL_LOGSTD].set(p["ba"][1])
    bh = bh.at[0, COL_VALUE].set(p["bc"][0])
    b12 = jnp.concatenate([p["b1"], p["b2"]])[None, :]   # [1, 384]
    return dict(w1=p["w1"], w2=p["w2"], wh=wh, b12=b12, bh=bh)


def reference_forward(x, p):
    h = jnp.maximum(x @ p["w1"] + p["b1"], 0.0)
    h = jnp.maximum(h @ p["w2"] + p["b2"], 0.0)
    a = h @ p["wa"] + p["ba"]
    mean = a[:, 0:1]
    std = jnp.exp(jnp.clip(a[:, 1:2], -10.0, 2.0))
    value = h @ p["wc"] + p["bc"]
    return mean, std, value


if __name__ == "__main__":
    key = jax.random.PRNGKey(0)
    k_params, k_x, k_x2 = jax.random.split(key, 3)

    num_inputs = 16
    params = init_params(k_params, num_inputs)
    packed = pack_params(params)

    # small module-consistent case: batch=8
    x = jax.random.normal(k_x, (8, num_inputs), jnp.float32)
    mean, std, value = continuous_actor_critic_forward(x, packed)
    jax.block_until_ready((mean, std, value))
    ref_mean, ref_std, ref_value = reference_forward(x, params)
    assert mean.shape == (8, 1) and std.shape == (8, 1) and value.shape == (8, 1)
    assert jnp.allclose(mean, ref_mean, atol=1e-5, rtol=1e-5)
    assert jnp.allclose(std, ref_std, atol=1e-5, rtol=1e-5)
    assert jnp.allclose(value, ref_value, atol=1e-5, rtol=1e-5)

    # gridded case: B not a multiple of tile_b exercises the batch grid + tail padding
    x2 = jax.random.normal(k_x2, (300, num_inputs), jnp.float32)
    mean2, std2, value2 = continuous_actor_critic_forward(x2, packed, tile_b=128)
    jax.block_until_ready((mean2, std2, value2))
    r2_mean, r2_std, r2_value = reference_forward(x2, params)
    assert mean2.shape == (300, 1) and std2.shape == (300, 1) and value2.shape == (300, 1)
    assert jnp.allclose(mean2, r2_mean, atol=1e-4, rtol=1e-4)
    assert jnp.allclose(std2, r2_std, atol=1e-4, rtol=1e-4)
    assert jnp.allclose(value2, r2_value, atol=1e-4, rtol=1e-4)

    print("KERNEL_OK")
</pallas_src>

<mosaic_0001>
module attributes {stable_mosaic.version = 11 : i64} {
  func.func @actor_critic_kernel(%arg0: i32, %arg1: memref<8x16xf32, #tpu.memory_space<vmem>>, %arg2: memref<16x256xf32, #tpu.memory_space<vmem>>, %arg3: memref<256x128xf32, #tpu.memory_space<vmem>>, %arg4: memref<128x128xf32, #tpu.memory_space<vmem>>, %arg5: memref<1x384xf32, #tpu.memory_space<vmem>>, %arg6: memref<1x128xf32, #tpu.memory_space<vmem>>, %arg7: memref<8x128xf32, #tpu.memory_space<vmem>>) attributes {dimension_semantics = [#tpu.dimension_semantics<parallel>], iteration_bounds = array<i64: 1>, scalar_prefetch = 0 : i64, scratch_operands = 0 : i64, tpu.core_type = #tpu.core_type<tc>, window_params = [{transform_indices = @transform_0, window_bounds = array<i64: 8, 16>}, {pipeline_mode = #tpu.pipeline_mode<synchronous>, transform_indices = @transform_1, window_bounds = array<i64: 16, 256>}, {pipeline_mode = #tpu.pipeline_mode<synchronous>, transform_indices = @transform_2, window_bounds = array<i64: 256, 128>}, {pipeline_mode = #tpu.pipeline_mode<synchronous>, transform_indices = @transform_3, window_bounds = array<i64: 128, 128>}, {pipeline_mode = #tpu.pipeline_mode<synchronous>, transform_indices = @transform_4, window_bounds = array<i64: 1, 384>}, {pipeline_mode = #tpu.pipeline_mode<synchronous>, transform_indices = @transform_5, window_bounds = array<i64: 1, 128>}, {transform_indices = @transform_6, window_bounds = array<i64: 8, 128>}]} {
    %c0 = arith.constant 0 : index
    %c0_0 = arith.constant 0 : index
    %0 = vector.load %arg1[%c0, %c0_0] : memref<8x16xf32, #tpu.memory_space<vmem>>, vector<8x16xf32>
    %c0_1 = arith.constant 0 : index
    %c0_2 = arith.constant 0 : index
    %1 = vector.load %arg5[%c0_1, %c0_2] : memref<1x384xf32, #tpu.memory_space<vmem>>, vector<1x256xf32>
    %c0_3 = arith.constant 0 : index
    %c256 = arith.constant 256 : index
    %2 = vector.load %arg5[%c0_3, %c256] : memref<1x384xf32, #tpu.memory_space<vmem>>, vector<1x128xf32>
    %c0_4 = arith.constant 0 : index
    %c0_5 = arith.constant 0 : index
    %3 = vector.load %arg2[%c0_4, %c0_5] : memref<16x256xf32, #tpu.memory_space<vmem>>, vector<16x256xf32>
    %cst = arith.constant dense<0.000000e+00> : vector<8x256xf32>
    %4 = tpu.matmul %0, %3, %cst {dimension_numbers = #tpu.dot_dimension_numbers<[1], [0], [0], [1], [0, 0, 1, 1], [], []>} : vector<8x16xf32>, vector<16x256xf32>, vector<8x256xf32> -> vector<8x256xf32>
    %5 = vector.broadcast %1 : vector<1x256xf32> to vector<8x256xf32>
    %6 = arith.addf %4, %5 : vector<8x256xf32>
    %cst_6 = arith.constant 0.000000e+00 : f32
    %7 = vector.broadcast %cst_6 : f32 to vector<8x256xf32>
    %8 = arith.maximumf %6, %7 : vector<8x256xf32>
    %c0_7 = arith.constant 0 : index
    %c0_8 = arith.constant 0 : index
    %9 = vector.load %arg3[%c0_7, %c0_8] : memref<256x128xf32, #tpu.memory_space<vmem>>, vector<256x128xf32>
    %cst_9 = arith.constant dense<0.000000e+00> : vector<8x128xf32>
    %10 = tpu.matmul %8, %9, %cst_9 {dimension_numbers = #tpu.dot_dimension_numbers<[1], [0], [0], [1], [0, 0, 1, 1], [], []>} : vector<8x256xf32>, vector<256x128xf32>, vector<8x128xf32> -> vector<8x128xf32>
    %11 = vector.broadcast %2 : vector<1x128xf32> to vector<8x128xf32>
    %12 = arith.addf %10, %11 : vector<8x128xf32>
    %cst_10 = arith.constant 0.000000e+00 : f32
    %13 = vector.broadcast %cst_10 : f32 to vector<8x128xf32>
    %14 = arith.maximumf %12, %13 : vector<8x128xf32>
    %c0_11 = arith.constant 0 : index
    %c0_12 = arith.constant 0 : index
    %15 = vector.load %arg4[%c0_11, %c0_12] : memref<128x128xf32, #tpu.memory_space<vmem>>, vector<128x128xf32>
    %cst_13 = arith.constant dense<0.000000e+00> : vector<8x128xf32>
    %16 = tpu.matmul %14, %15, %cst_13 {dimension_numbers = #tpu.dot_dimension_numbers<[1], [0], [0], [1], [0, 0, 1, 1], [], []>} : vector<8x128xf32>, vector<128x128xf32>, vector<8x128xf32> -> vector<8x128xf32>
    %c0_14 = arith.constant 0 : index
    %c0_15 = arith.constant 0 : index
    %17 = vector.load %arg6[%c0_14, %c0_15] : memref<1x128xf32, #tpu.memory_space<vmem>>, vector<1x128xf32>
    %18 = vector.broadcast %17 : vector<1x128xf32> to vector<8x128xf32>
    %19 = arith.addf %16, %18 : vector<8x128xf32>
    %cst_16 = arith.constant -1.000000e+01 : f32
    %cst_17 = arith.constant 2.000000e+00 : f32
    %20 = vector.broadcast %cst_16 : f32 to vector<8x128xf32>
    %21 = arith.maximumf %20, %19 : vector<8x128xf32>
    %22 = vector.broadcast %cst_17 : f32 to vector<8x128xf32>
    %23 = arith.minimumf %22, %21 : vector<8x128xf32>
    %24 = math.exp %23 : vector<8x128xf32>
    %25 = tpu.iota {dimensions = array<i32: 1>} : vector<8x128xi32>
    %c1_i32 = arith.constant 1 : i32
    %26 = vector.broadcast %c1_i32 : i32 to vector<8x128xi32>
    %27 = arith.cmpi eq, %25, %26 : vector<8x128xi32>
    %28 = arith.select %27, %24, %19 : vector<8x128xi1>, vector<8x128xf32>
    %c0_18 = arith.constant 0 : index
    %c0_19 = arith.constant 0 : index
    %29 = vector.load %arg7[%c0_18, %c0_19] : memref<8x128xf32, #tpu.memory_space<vmem>>, vector<8x128xf32>
    tpu.vector_store %arg7[%c0_18, %c0_19], %28 {strides = array<i32>} : memref<8x128xf32, #tpu.memory_space<vmem>>, vector<8x128xf32>,
    return
  }
  func.func @transform_0(%arg0: i32) -> (i32, i32) {
    %c0_i32 = arith.constant 0 : i32
    %c0_i32_0 = arith.constant 0 : i32
    return %arg0, %c0_i32 : i32, i32
  }
  func.func @transform_1(%arg0: i32) -> (i32, i32) {
    %c0_i32 = arith.constant 0 : i32
    %c0_i32_0 = arith.constant 0 : i32
    %c0_i32_1 = arith.constant 0 : i32
    return %c0_i32, %c0_i32_0 : i32, i32
  }
  func.func @transform_2(%arg0: i32) -> (i32, i32) {
    %c0_i32 = arith.constant 0 : i32
    %c0_i32_0 = arith.constant 0 : i32
    %c0_i32_1 = arith.constant 0 : i32
    return %c0_i32, %c0_i32_0 : i32, i32
  }
  func.func @transform_3(%arg0: i32) -> (i32, i32) {
    %c0_i32 = arith.constant 0 : i32
    %c0_i32_0 = arith.constant 0 : i32
    %c0_i32_1 = arith.constant 0 : i32
    return %c0_i32, %c0_i32_0 : i32, i32
  }
  func.func @transform_4(%arg0: i32) -> (i32, i32) {
    %c0_i32 = arith.constant 0 : i32
    %c0_i32_0 = arith.constant 0 : i32
    %c0_i32_1 = arith.constant 0 : i32
    return %c0_i32, %c0_i32_0 : i32, i32
  }
  func.func @transform_5(%arg0: i32) -> (i32, i32) {
    %c0_i32 = arith.constant 0 : i32
    %c0_i32_0 = arith.constant 0 : i32
    %c0_i32_1 = arith.constant 0 : i32
    return %c0_i32, %c0_i32_0 : i32, i32
  }
  func.func @transform_6(%arg0: i32) -> (i32, i32) {
    %c0_i32 = arith.constant 0 : i32
    %c0_i32_0 = arith.constant 0 : i32
    return %arg0, %c0_i32 : i32, i32
  }
}

</mosaic_0001>

<llo_original>
// kernel: tpu_custom_call.1
$region0: #{tpu_custom_call.1}
  #allocation0 [shape = 'u32[]', space=smem, size = 0x4, offset = 0x4, fixed_abs, tag = 'smem constant byte address 0x4 - core index']
  #allocation1 [shape = 'u32[72,128]{1,0:T(1,128)}', space=vmem, size = 0x9000, scoped, tag = 'internal scratch']
  %s0 = inlined_call_operand.hbm [shape: f32[8,16], index: 0, kind: input, shape index: {}]
  %s1 = inlined_call_operand.hbm [shape: f32[16,256], index: 1, kind: input, shape index: {}]
  %s2 = inlined_call_operand.hbm [shape: f32[256,128], index: 2, kind: input, shape index: {}]
  %s3 = inlined_call_operand.hbm [shape: f32[128,128], index: 3, kind: input, shape index: {}]
  %s4 = inlined_call_operand.vmem [shape: f32[1,384], index: 4, kind: input, shape index: {}]
  %s5 = inlined_call_operand.vmem [shape: f32[1,128], index: 5, kind: input, shape index: {}]
  %s6 = inlined_call_operand.hbm [shape: f32[8,128], index: 6, kind: output, shape index: {}]
  %s7 = sld [smem:[#allocation0]]
  $region50: #{tpu_custom_call.1} parent=0
    _
  %s9 = ssub.s32 1, %s7
  %s10 = scalar_select 0, %s9, %s7
  $region1: #{tpu_custom_call.1} parent=0
    #allocation2 [shape = 'u8[4096]{0}', space=vmem, size = 0x1000, scoped, tag = 'input window, operand 0, single buffered']
    #allocation3 [shape = 's32[1]{0}', space=sflag, size = 0x4, scoped, tag = 'scoped memory for tpu_custom_call.1']
    #allocation4 [shape = 's32[1]{0}', space=sflag, size = 0x4, scoped, tag = 'scoped memory for tpu_custom_call.1']
    #allocation5 [shape = 'u8[16384]{0}', space=vmem, size = 0x4000, scoped, tag = 'input window, operand 1, single buffered']
    #allocation6 [shape = 's32[1]{0}', space=sflag, size = 0x4, scoped, tag = 'scoped memory for tpu_custom_call.1']
    #allocation7 [shape = 'u8[131072]{0}', space=vmem, size = 0x20000, scoped, tag = 'input window, operand 2, single buffered']
    #allocation8 [shape = 'u8[65536]{0}', space=vmem, size = 0x10000, scoped, tag = 'input window, operand 3, single buffered']
    #allocation9 [shape = 's32[1]{0}', space=sflag, size = 0x4, scoped, tag = 'scoped memory for tpu_custom_call.1']
    #allocation10 [shape = 'u8[4096]{0}', space=vmem, size = 0x1000, scoped, tag = 'output window, operand 0, single buffered']
    %11 = vsyncpa [#allocation3], 0
    %12 = vsyncpa [#allocation6], 0
    %13 = vsyncpa [#allocation9], 0
    %14 = vsyncpa [#allocation4], 0
    // Predicated region
    $region2: #{tpu_custom_call.1} parent=1 // pred_check
      _
    $region3: #{tpu_custom_call.1} parent=1 // pred_check_branch
      %16 = sbr.rel (0) target = $region5
    $region4: #{tpu_custom_call.1} parent=1 // pred_region
      %18 = vsyncadd [#allocation3], 0
      %s20 = sshll.u32 %s0, 4
      %s21 = int_to_ptr.hbm [resolvable:$true] %s20
      %s22 = sshll.u32 [#allocation2], 4
      %s23 = int_to_ptr.vmem [resolvable:$true] %s22
      %25 = dma.hbm_to_vmem [thread:$0]  %s21, 128, %s23, [#allocation3]
    $region5: #{tpu_custom_call.1} parent=1 // pred_fallthru
      _
    // Predicated region
    $region6: #{tpu_custom_call.1} parent=1 // pred_check
      _
    $region7: #{tpu_custom_call.1} parent=1 // pred_check_branch
      %27 = sbr.rel (0) target = $region9
    $region8: #{tpu_custom_call.1} parent=1 // pred_region
      %29 = vsyncadd [#allocation6], 0
      %s30 = sshll.u32 %s1, 4
      %s31 = int_to_ptr.hbm [resolvable:$true] %s30
      %s32 = sshll.u32 [#allocation5], 4
      %s33 = int_to_ptr.vmem [resolvable:$true] %s32
      %38 = dma.hbm_to_vmem [thread:$0]  %s31, 512, %s33, [#allocation6], 256, 256, 16
    $region9: #{tpu_custom_call.1} parent=1 // pred_fallthru
      _
    // Predicated region
    $region10: #{tpu_custom_call.1} parent=1 // pred_check
      _
    $region11: #{tpu_custom_call.1} parent=1 // pred_check_branch
      %40 = sbr.rel (0) target = $region13
    $region12: #{tpu_custom_call.1} parent=1 // pred_region
      %42 = vsyncadd [#allocation6], 0
      %s43 = sshll.u32 %s2, 4
      %s44 = int_to_ptr.hbm [resolvable:$true] %s43
      %s45 = sshll.u32 [#allocation7], 4
      %s46 = int_to_ptr.vmem [resolvable:$true] %s45
      %51 = dma.hbm_to_vmem [thread:$0]  %s44, 4096, %s46, [#allocation6], 128, 128, 8
    $region13: #{tpu_custom_call.1} parent=1 // pred_fallthru
      _
    // Predicated region
    $region14: #{tpu_custom_call.1} parent=1 // pred_check
      _
    $region15: #{tpu_custom_call.1} parent=1 // pred_check_branch
      %53 = sbr.rel (0) target = $region17
    $region16: #{tpu_custom_call.1} parent=1 // pred_region
      %55 = vsyncadd [#allocation9], 0
      %s56 = sshll.u32 %s3, 4
      %s57 = int_to_ptr.hbm [resolvable:$true] %s56
      %s58 = sshll.u32 [#allocation8], 4
      %s59 = int_to_ptr.vmem [resolvable:$true] %s58
      %64 = dma.hbm_to_vmem [thread:$0]  %s57, 2048, %s59, [#allocation9], 128, 128, 8
    $region17: #{tpu_custom_call.1} parent=1 // pred_fallthru
      _
    // Predicated region
    $region18: #{tpu_custom_call.1} parent=1 // pred_check
      _
    $region19: #{tpu_custom_call.1} parent=1 // pred_check_branch
      %66 = sbr.rel (0) target = $region21
    $region20: #{tpu_custom_call.1} parent=1 // pred_region
      _
    $region21: #{tpu_custom_call.1} parent=1 // pred_fallthru
      _
    // Predicated region
    $region22: #{tpu_custom_call.1} parent=1 // pred_check
      _
    $region23: #{tpu_custom_call.1} parent=1 // pred_check_branch
      %68 = sbr.rel (0) target = $region25
    $region24: #{tpu_custom_call.1} parent=1 // pred_region
      _
    $region25: #{tpu_custom_call.1} parent=1 // pred_fallthru
      _
    // Predicated region
    $region26: #{tpu_custom_call.1} parent=1 // pred_check
      _
    $region27: #{tpu_custom_call.1} parent=1 // pred_check_branch
      %70 = sbr.rel (0) target = $region29
    $region28: #{tpu_custom_call.1} parent=1 // pred_region
      %72 = dma.done [#allocation3], 128
    $region29: #{tpu_custom_call.1} parent=1 // pred_fallthru
      _
    // Predicated region
    $region30: #{tpu_custom_call.1} parent=1 // pred_check
      _
    $region31: #{tpu_custom_call.1} parent=1 // pred_check_branch
      %74 = sbr.rel (0) target = $region33
    $region32: #{tpu_custom_call.1} parent=1 // pred_region
      %76 = dma.done [#allocation6], 512
    $region33: #{tpu_custom_call.1} parent=1 // pred_fallthru
      _
    // Predicated region
    $region34: #{tpu_custom_call.1} parent=1 // pred_check
      _
    $region35: #{tpu_custom_call.1} parent=1 // pred_check_branch
      %78 = sbr.rel (0) target = $region37
    $region36: #{tpu_custom_call.1} parent=1 // pred_region
      %80 = dma.done [#allocation6], 4096
    $region37: #{tpu_custom_call.1} parent=1 // pred_fallthru
      _
    // Predicated region
    $region38: #{tpu_custom_call.1} parent=1 // pred_check
      _
    $region39: #{tpu_custom_call.1} parent=1 // pred_check_branch
      %82 = sbr.rel (0) target = $region41
    $region40: #{tpu_custom_call.1} parent=1 // pred_region
      %84 = dma.done [#allocation9], 2048
    $region41: #{tpu_custom_call.1} parent=1 // pred_fallthru
      _
    %v85 = vld [vmem:[#allocation2] sm:$0xff]
    %v86 = vld [vmem:[%s4] sm:$0x3]
    %v87 = vld [vmem:[%s4 + $0x2] sm:$0x1]
    %v88 = vld [vmem:[#allocation5] sm:$0xff]
    %v89 = vld [vmem:[#allocation5 + $0x8] sm:$0xff]
    %v90 = vld [vmem:[#allocation5 + $0x10] sm:$0xff]
    %v91 = vld [vmem:[#allocation5 + $0x18] sm:$0xff]
    %v93 = vperm.slane %v86, 0
    %v94 = vperm.slane %v86, 1
    %vm97 = vcmask 130048
    %v99 = vsel %vm97, %v85, 0
    %101 = vmatpush.msra.mxu0 0.0
    %102 = vmatpush.msra.mxu0 0.0
    %103 = vmatpush.msra.mxu0 0.0
    %104 = vmatpush.msra.mxu0 0.0
    %105 = vmatpush.msra.mxu0 0.0
    %106 = vmatpush.msra.mxu0 0.0
    %107 = vmatpush.msra.mxu0 0.0
    %108 = vmatpush.msra.mxu0 0.0
    %109 = vmatpush.msra.mxu0 0.0
    %110 = vmatpush.msra.mxu0 0.0
    %111 = vmatpush.msra.mxu0 0.0
    %112 = vmatpush.msra.mxu0 0.0
    %113 = vmatpush.msra.mxu0 0.0
    %114 = vmatpush.msra.mxu0 0.0
    %115 = vmatpush.msra.mxu0 %v90
    %116 = vmatpush.msra.mxu0 %v88
    %117 = vmatmul.f32.gmra.mxu0 %v99
    %v118 = vpop.f32.mrf.mxu0
    %v119 = vadd.f32 %v93, %v118
    %120 = vdwg.mxu0
    %121 = vmatpush.msra.mxu0 0.0
    %122 = vmatpush.msra.mxu0 0.0
    %123 = vmatpush.msra.mxu0 0.0
    %124 = vmatpush.msra.mxu0 0.0
    %125 = vmatpush.msra.mxu0 0.0
    %126 = vmatpush.msra.mxu0 0.0
    %127 = vmatpush.msra.mxu0 0.0
    %128 = vmatpush.msra.mxu0 0.0
    %129 = vmatpush.msra.mxu0 0.0
    %130 = vmatpush.msra.mxu0 0.0
    %131 = vmatpush.msra.mxu0 0.0
    %132 = vmatpush.msra.mxu0 0.0
    %133 = vmatpush.msra.mxu0 0.0
    %134 = vmatpush.msra.mxu0 0.0
    %135 = vmatpush.msra.mxu0 %v91
    %136 = vmatpush.msra.mxu0 %v89
    %137 = vmatmul.f32.gmra.mxu0 %v99
    %v138 = vpop.f32.mrf.mxu0
    %v139 = vadd.f32 %v94, %v138
    %140 = vdwg.mxu0
    %v141 = vmax.f32 %v119, 0.0
    %v142 = vmax.f32 %v139, 0.0
    %v143 = vld [vmem:[#allocation7] sm:$0xff]
    %v144 = vld [vmem:[#allocation7 + $0x8] sm:$0xff]
    %v145 = vld [vmem:[#allocation7 + $0x10] sm:$0xff]
    %v146 = vld [vmem:[#allocation7 + $0x18] sm:$0xff]
    %v147 = vld [vmem:[#allocation7 + $0x20] sm:$0xff]
    %v148 = vld [vmem:[#allocation7 + $0x28] sm:$0xff]
    %v149 = vld [vmem:[#allocation7 + $0x30] sm:$0xff]
    %v150 = vld [vmem:[#allocation7 + $0x38] sm:$0xff]
    %v151 = vld [vmem:[#allocation7 + $0x40] sm:$0xff]
    %v152 = vld [vmem:[#allocation7 + $0x48] sm:$0xff]
    %v153 = vld [vmem:[#allocation7 + $0x50] sm:$0xff]
    %v154 = vld [vmem:[#allocation7 + $0x58] sm:$0xff]
    %v155 = vld [vmem:[#allocation7 + $0x60] sm:$0xff]
    %v156 = vld [vmem:[#allocation7 + $0x68] sm:$0xff]
    %v157 = vld [vmem:[#allocation7 + $0x70] sm:$0xff]
    %v158 = vld [vmem:[#allocation7 + $0x78] sm:$0xff]
    %v159 = vld [vmem:[#allocation7 + $0x80] sm:$0xff]
    %v160 = vld [vmem:[#allocation7 + $0x88] sm:$0xff]
    %v161 = vld [vmem:[#allocation7 + $0x90] sm:$0xff]
    %v162 = vld [vmem:[#allocation7 + $0x98] sm:$0xff]
    %v163 = vld [vmem:[#allocation7 + $0xa0] sm:$0xff]
    %v164 = vld [vmem:[#allocation7 + $0xa8] sm:$0xff]
    %v165 = vld [vmem:[#allocation7 + $0xb0] sm:$0xff]
    %v166 = vld [vmem:[#allocation7 + $0xb8] sm:$0xff]
    %v167 = vld [vmem:[#allocation7 + $0xc0] sm:$0xff]
    %v168 = vld [vmem:[#allocation7 + $0xc8] sm:$0xff]
    %v169 = vld [vmem:[#allocation7 + $0xd0] sm:$0xff]
    %v170 = vld [vmem:[#allocation7 + $0xd8] sm:$0xff]
    %v171 = vld [vmem:[#allocation7 + $0xe0] sm:$0xff]
    %v172 = vld [vmem:[#allocation7 + $0xe8] sm:$0xff]
    %v173 = vld [vmem:[#allocation7 + $0xf0] sm:$0xff]
    %v174 = vld [vmem:[#allocation7 + $0xf8] sm:$0xff]
    %v176 = vperm.slane %v87, 0
    %178 = vmatpush.msra.mxu0 %v158
    %179 = vmatpush.msra.mxu0 %v157
    %180 = vmatpush.msra.mxu0 %v156
    %181 = vmatpush.msra.mxu0 %v155
    %182 = vmatpush.msra.mxu0 %v154
    %183 = vmatpush.msra.mxu0 %v153
    %184 = vmatpush.msra.mxu0 %v152
    %185 = vmatpush.msra.mxu0 %v151
    %186 = vmatpush.msra.mxu0 %v150
    %187 = vmatpush.msra.mxu0 %v149
    %188 = vmatpush.msra.mxu0 %v148
    %189 = vmatpush.msra.mxu0 %v147
    %190 = vmatpush.msra.mxu0 %v146
    %191 = vmatpush.msra.mxu0 %v145
    %192 = vmatpush.msra.mxu0 %v144
    %193 = vmatpush.msra.mxu0 %v143
    %194 = vmatmul.f32.gmra.mxu0 %v141
    %v195 = vpop.f32.mrf.mxu0
    %v196 = vadd.f32 %v176, %v195
    %197 = vdwg.mxu0
    %198 = vmatpush.msra.mxu0 %v174
    %199 = vmatpush.msra.mxu0 %v173
    %200 = vmatpush.msra.mxu0 %v172
    %201 = vmatpush.msra.mxu0 %v171
    %202 = vmatpush.msra.mxu0 %v170
    %203 = vmatpush.msra.mxu0 %v169
    %204 = vmatpush.msra.mxu0 %v168
    %205 = vmatpush.msra.mxu0 %v167
    %206 = vmatpush.msra.mxu0 %v166
    %207 = vmatpush.msra.mxu0 %v165
    %208 = vmatpush.msra.mxu0 %v164
    %209 = vmatpush.msra.mxu0 %v163
    %210 = vmatpush.msra.mxu0 %v162
    %211 = vmatpush.msra.mxu0 %v161
    %212 = vmatpush.msra.mxu0 %v160
    %213 = vmatpush.msra.mxu0 %v159
    %214 = vmatmul.f32.gmra.mxu0 %v142
    %v215 = vpop.f32.mrf.mxu0
    %v216 = vadd.f32 %v196, %v215
    %217 = vdwg.mxu0
    %v218 = vmax.f32 %v216, 0.0
    %v219 = vld [vmem:[#allocation8] sm:$0xff]
    %v220 = vld [vmem:[#allocation8 + $0x8] sm:$0xff]
    %v221 = vld [vmem:[#allocation8 + $0x10] sm:$0xff]
    %v222 = vld [vmem:[#allocation8 + $0x18] sm:$0xff]
    %v223 = vld [vmem:[#allocation8 + $0x20] sm:$0xff]
    %v224 = vld [vmem:[#allocation8 + $0x28] sm:$0xff]
    %v225 = vld [vmem:[#allocation8 + $0x30] sm:$0xff]
    %v226 = vld [vmem:[#allocation8 + $0x38] sm:$0xff]
    %v227 = vld [vmem:[#allocation8 + $0x40] sm:$0xff]
    %v228 = vld [vmem:[#allocation8 + $0x48] sm:$0xff]
    %v229 = vld [vmem:[#allocation8 + $0x50] sm:$0xff]
    %v230 = vld [vmem:[#allocation8 + $0x58] sm:$0xff]
    %v231 = vld [vmem:[#allocation8 + $0x60] sm:$0xff]
    %v232 = vld [vmem:[#allocation8 + $0x68] sm:$0xff]
    %v233 = vld [vmem:[#allocation8 + $0x70] sm:$0xff]
    %v234 = vld [vmem:[#allocation8 + $0x78] sm:$0xff]
    %v235 = vld [vmem:[%s5] sm:$0x1]
    %v237 = vperm.slane %v235, 0
    %239 = vmatpush.msra.mxu0 %v234
    %240 = vmatpush.msra.mxu0 %v233
    %241 = vmatpush.msra.mxu0 %v232
    %242 = vmatpush.msra.mxu0 %v231
    %243 = vmatpush.msra.mxu0 %v230
    %244 = vmatpush.msra.mxu0 %v229
    %245 = vmatpush.msra.mxu0 %v228
    %246 = vmatpush.msra.mxu0 %v227
    %247 = vmatpush.msra.mxu0 %v226
    %248 = vmatpush.msra.mxu0 %v225
    %249 = vmatpush.msra.mxu0 %v224
    %250 = vmatpush.msra.mxu0 %v223
    %251 = vmatpush.msra.mxu0 %v222
    %252 = vmatpush.msra.mxu0 %v221
    %253 = vmatpush.msra.mxu0 %v220
    %254 = vmatpush.msra.mxu0 %v219
    %255 = vmatmul.f32.gmra.mxu0 %v218
    %v256 = vpop.f32.mrf.mxu0
    %v257 = vadd.f32 %v237, %v256
    %258 = vdwg.mxu0
    %v259 = vmax.f32 %v257, -10.0
    %v260 = vmin.f32 %v259, 2.0
    %v261 = vmul.f32 %v260, 1.442695
    %v262 = vpow.pop %v261
    %v263 = vlaneseq
    %v264 = vand.u32 %v263, 127
    %vm265 = vcmp.eq.s32.totalorder %v264, 1
    %v266 = vsel %vm265, %v262, %v257
    %267 = vst [vmem:[#allocation10] sm:$0xff] %v266
    // Predicated region
    $region42: #{tpu_custom_call.1} parent=1 // pred_check
      _
    $region43: #{tpu_custom_call.1} parent=1 // pred_check_branch
      %269 = sbr.rel (0) target = $region45
    $region44: #{tpu_custom_call.1} parent=1 // pred_region
      %271 = vsyncadd [#allocation4], 0
      %s273 = sshll.u32 [#allocation10], 4
      %s274 = int_to_ptr.vmem [resolvable:$true] %s273
      %s275 = sshll.u32 %s6, 4
      %s276 = int_to_ptr.hbm [resolvable:$true] %s275
      %278 = dma.vmem_to_hbm [thread:$0]  %s274, 128, %s276, [#allocation4]
    $region45: #{tpu_custom_call.1} parent=1 // pred_fallthru
      _
    // Predicated region
    $region46: #{tpu_custom_call.1} parent=1 // pred_check
      _
    $region47: #{tpu_custom_call.1} parent=1 // pred_check_branch
      %280 = sbr.rel (0) target = $region49
    $region48: #{tpu_custom_call.1} parent=1 // pred_region
      %282 = dma.done [#allocation4], 128
    $region49: #{tpu_custom_call.1} parent=1 // pred_fallthru
      _
    %283 = vsyncpa [#allocation3], 1
    %284 = vsyncpa [#allocation6], 1
    %285 = vsyncpa [#allocation9], 1
    %286 = vsyncpa [#allocation4], 1

</llo_original>
